<compile_context>
chip_gen: v5e
topology: v5e:2x2
jax: 0.10.0
libtpu: 0.0.40
codegen_flags: <defaults>
</compile_context>

<pallas_src>
import functools

import jax
import jax.numpy as jnp
from jax.experimental import pallas as pl
from jax.experimental.pallas import tpu as pltpu

LANES = 128


def _round_up(a, m):
    return ((a + m - 1) // m) * m


def _default_num_parts():
    """2 partial sums on multi-TensorCore chips, 1 on single-core chips."""
    try:
        kind = jax.devices()[0].device_kind.lower()
    except Exception:
        return 1
    if ("v7" in kind) or ("v4" in kind) or ("v5p" in kind):
        return 2
    return 1


def _focal_loss_kernel(x_ref, t_ref, o_ref, acc_ref, *, gamma, block_rows,
                       first_padded_blk, total_n, binary_targets,
                       approx_reciprocal):
    p = pl.program_id(0)
    i = pl.program_id(1)
    n_inner = pl.num_programs(1)

    @pl.when(i == 0)
    def _():
        acc_ref[...] = jnp.zeros_like(acc_ref)

    x = x_ref[...].astype(jnp.float32)
    t = t_ref[...].astype(jnp.float32)

    # Stable BCE-with-logits:
    #   x - x*t + max(-x,0) + log(1 + exp(-|x|)) == max(x,0) - x*t + log(1+e)
    # For binary targets |x*(2t-1)| == |x|, so exp/log are computed once and
    # shared with the focal-weight path.
    ax = jnp.abs(x)
    e = jnp.exp(-ax)
    lg = jnp.log(1.0 + e)
    bce = jnp.maximum(x, 0.0) - x * t + lg

    if binary_targets:
        ez = e                                      # |z| == |x|
        # sign(x*(2t-1)) > 0  <=>  (x > 0) == (t > 0.5)  (XNOR via XOR).
        z_pos = jnp.logical_xor(x > 0.0, t <= 0.5)
    else:
        z = x * (t * 2.0 - 1.0)
        ez = jnp.exp(-jnp.abs(z))
        z_pos = z > 0.0

    int_gamma = float(gamma).is_integer() and 0 <= int(gamma) <= 8
    if int_gamma:
        g = int(gamma)
        if g == 0:
            contrib = bce
        else:
            # Focal weight = sigmoid(-z)**gamma, with
            #   sigmoid(-z) = where(z>0, exp(-|z|), 1) / (1 + exp(-|z|)):
            # one reciprocal instead of exp(gamma * logsigmoid(-z)).
            inv = pl.reciprocal(1.0 + ez, approx=approx_reciprocal)
            w = jnp.where(z_pos, ez, 1.0) * inv
            weight = w
            for _ in range(g - 1):
                weight = weight * w
            contrib = weight * bce
    else:
        # logsigmoid(-z) = -(max(z,0) + log(1 + exp(-|z|)))
        if binary_targets:
            max_z = jnp.where(z_pos, ax, 0.0)
            lgz = lg
        else:
            max_z = jnp.maximum(z, 0.0)
            lgz = jnp.log(1.0 + ez)
        invprobs = -(max_z + lgz)
        contrib = jnp.exp(invprobs * jnp.float32(gamma)) * bce

    gblk = p * n_inner + i              # global row-block index
    n_sub = block_rows // 8

    @pl.when(gblk < first_padded_blk)
    def _():
        # Fully-valid tile: no mask work on the hot path.
        acc_ref[...] += jnp.sum(contrib.reshape(n_sub, 8, LANES), axis=0)

    @pl.when(gblk >= first_padded_blk)
    def _():
        # Tile contains lane padding / garbage partial-block rows, or is a
        # clamped duplicate overhang tile (rem <= 0 -> contributes zero).
        # TODO(synk): int32 index math limits inputs to < 2**31 elements.
        rem = total_n - gblk * (block_rows * LANES)
        row_idx = jax.lax.broadcasted_iota(jnp.int32, (block_rows, LANES), 0)
        lane_idx = jax.lax.broadcasted_iota(jnp.int32, (block_rows, LANES), 1)
        local = row_idx * LANES + lane_idx
        masked = jnp.where(local < rem, contrib, 0.0)
        acc_ref[...] += jnp.sum(masked.reshape(n_sub, 8, LANES), axis=0)

    @pl.when(i == n_inner - 1)
    def _():
        o_ref[0] = acc_ref[...]         # lane-dense (8,128) store per part


def focal_loss(input_, target, gamma, *, block_rows=None, num_parts=None,
               assume_binary_targets=False, approx_reciprocal=False):
    """Pallas implementation of FocalLoss(gamma)(input, target) -> scalar mean."""
    if input_.shape != target.shape:
        raise ValueError(
            "Target size ({}) must be the same as input size ({})".format(
                target.shape, input_.shape))

    n = int(input_.size)
    rows = pl.cdiv(n, LANES)

    # Minimum sublane multiple for the narrower dtype: (8,128) f32,
    # (16,128) bf16/f16, (32,128) 8-bit.
    min_itemsize = min(jnp.dtype(input_.dtype).itemsize,
                       jnp.dtype(target.dtype).itemsize)
    mult = {4: 8, 2: 16, 1: 32}.get(min_itemsize, 8)

    # ~2 MiB of the wider input per pipeline buffer -> 2 inputs x 2 buffers
    # = 8 MiB of VMEM, inside default scoped limits on v5e/v6e/v7x.  Raise
    # vmem_limit_bytes via CompilerParams before going much larger.
    if block_rows is None:
        max_itemsize = max(jnp.dtype(input_.dtype).itemsize,
                           jnp.dtype(target.dtype).itemsize)
        block_rows = (2 * 1024 * 1024) // (LANES * max_itemsize)
    block_rows = max(mult, (int(block_rows) // mult) * mult)
    block_rows = min(block_rows, _round_up(rows, mult))
    block_elems = block_rows * LANES

    total_blocks = pl.cdiv(rows, block_rows)
    if num_parts is None:
        num_parts = _default_num_parts()
    num_parts = max(1, min(int(num_parts), total_blocks))
    inner_blocks = pl.cdiv(total_blocks, num_parts)

    # First row-block index containing any invalid element (== total_blocks
    # when everything divides evenly).
    first_padded_blk = n // block_elems

    xf = input_.reshape(-1)
    tf = target.reshape(-1)
    lane_pad = rows * LANES - n
    if lane_pad:
        # TODO(synk): this <128-element tail pad still copies both arrays in
        # XLA; handle the tail in plain JAX if very large non-128-multiple
        # inputs ever matter.
        xf = jnp.pad(xf, (0, lane_pad))
        tf = jnp.pad(tf, (0, lane_pad))
    xf = xf.reshape(rows, LANES)
    tf = tf.reshape(rows, LANES)

    kernel = functools.partial(
        _focal_loss_kernel,
        gamma=float(gamma),
        block_rows=block_rows,
        first_padded_blk=first_padded_blk,
        total_n=n,
        binary_targets=assume_binary_targets,
        approx_reciprocal=approx_reciprocal,
    )

    # Overhanging grid steps (num_parts not dividing total_blocks) re-read
    # the last real block via a clamped index and are masked to zero in the
    # kernel -- no block-multiple padding of the inputs is ever materialized.
    def in_index_map(p, i):
        return (jnp.minimum(p * inner_blocks + i, total_blocks - 1), 0)

    partials = pl.pallas_call(
        kernel,
        out_shape=jax.ShapeDtypeStruct((num_parts, 8, LANES), jnp.float32),
        grid_spec=pltpu.PrefetchScalarGridSpec(
            num_scalar_prefetch=0,
            grid=(num_parts, inner_blocks),
            in_specs=[
                pl.BlockSpec((block_rows, LANES), in_index_map),
                pl.BlockSpec((block_rows, LANES), in_index_map),
            ],
            out_specs=pl.BlockSpec((1, 8, LANES), lambda p, i: (p, 0, 0)),
            scratch_shapes=[pltpu.VMEM((8, LANES), jnp.float32)],
        ),
        compiler_params=pltpu.CompilerParams(
            dimension_semantics=("parallel", "arbitrary")),
    )(xf, tf)
    return jnp.sum(partials) / n


def _focal_loss_ref(input_, target, gamma):
    """Pure-JAX reference mirroring the PyTorch forward."""
    x = input_.astype(jnp.float32)
    t = target.astype(jnp.float32)
    max_val = jnp.maximum(-x, 0.0)
    loss = x - x * t + max_val + jnp.log(jnp.exp(-max_val) + jnp.exp(-x - max_val))
    invprobs = jax.nn.log_sigmoid(-x * (t * 2.0 - 1.0))
    loss = jnp.exp(invprobs * gamma) * loss
    return jnp.mean(loss)


if __name__ == "__main__":
    key = jax.random.PRNGKey(0)
    k1, k2, k3, k4 = jax.random.split(key, 4)

    # Logits and binary targets, NCHW-shaped like a segmentation head output.
    x = jax.random.normal(k1, (2, 4, 16, 16), dtype=jnp.float32)
    t = (jax.random.uniform(k2, (2, 4, 16, 16)) > 0.5).astype(jnp.float32)

    gamma = 2.0
    ref = _focal_loss_ref(x, t, gamma)

    # Binary fast path, integer gamma.
    out = jax.block_until_ready(focal_loss(x, t, gamma,
                                           assume_binary_targets=True))
    assert jnp.allclose(out, ref, rtol=1e-5, atol=1e-5), (out, ref)

    # General (non-binary-target) path.
    out_g = jax.block_until_ready(focal_loss(x, t, gamma))
    assert jnp.allclose(out_g, ref, rtol=1e-5, atol=1e-5), (out_g, ref)

    # Non-integer gamma path.
    ref_ng = _focal_loss_ref(x, t, 1.7)
    out_ng = jax.block_until_ready(
        focal_loss(x, t, 1.7, assume_binary_targets=True))
    assert jnp.allclose(out_ng, ref_ng, rtol=1e-5, atol=1e-5), (out_ng, ref_ng)

    # Partial-tile mask + clamped overhang coverage: rows=20, block_rows=8,
    # 2 parts over 3 blocks -> one duplicated (masked-to-zero) grid step and
    # one partially-valid tile.
    x2 = jax.random.normal(k3, (2, 4, 16, 20), dtype=jnp.float32)
    t2 = (jax.random.uniform(k4, (2, 4, 16, 20)) > 0.5).astype(jnp.float32)
    ref2 = _focal_loss_ref(x2, t2, gamma)
    out2 = jax.block_until_ready(
        focal_loss(x2, t2, gamma, block_rows=8, num_parts=2,
                   assume_binary_targets=True))
    assert jnp.allclose(out2, ref2, rtol=1e-5, atol=1e-5), (out2, ref2)

    print("KERNEL_OK")
</pallas_src>

<mosaic_0001>
module attributes {stable_mosaic.version = 11 : i64} {
  func.func @_focal_loss_kernel(%arg0: i32, %arg1: i32, %arg2: memref<16x128xf32, #tpu.memory_space<vmem>>, %arg3: memref<16x128xf32, #tpu.memory_space<vmem>>, %arg4: memref<1x8x128xf32, #tpu.memory_space<vmem>>, %arg5: memref<8x128xf32, #tpu.memory_space<vmem>>) attributes {dimension_semantics = [#tpu.dimension_semantics<parallel>, #tpu.dimension_semantics<arbitrary>], iteration_bounds = array<i64: 1, 1>, scalar_prefetch = 0 : i64, scratch_operands = 1 : i64, tpu.core_type = #tpu.core_type<tc>, window_params = [{transform_indices = @transform_0, window_bounds = array<i64: 16, 128>}, {transform_indices = @transform_1, window_bounds = array<i64: 16, 128>}, {transform_indices = @transform_2, window_bounds = array<i64: 1, 8, 128>}]} {
    %c0_i32 = arith.constant 0 : i32
    %0 = arith.cmpi eq, %arg1, %c0_i32 : i32
    %1 = arith.extui %0 : i1 to i32
    %c0_i32_0 = arith.constant 0 : i32
    %2 = arith.cmpi ne, %1, %c0_i32_0 : i32
    scf.if %2 {
      %cst_16 = arith.constant 0.000000e+00 : f32
      %41 = vector.broadcast %cst_16 : f32 to vector<8x128xf32>
      %c0_17 = arith.constant 0 : index
      %c0_18 = arith.constant 0 : index
      %42 = vector.load %arg5[%c0_17, %c0_18] : memref<8x128xf32, #tpu.memory_space<vmem>>, vector<8x128xf32>
      tpu.vector_store %arg5[%c0_17, %c0_18], %41 {strides = array<i32>} : memref<8x128xf32, #tpu.memory_space<vmem>>, vector<8x128xf32>,
    } else {
    }
    %c0 = arith.constant 0 : index
    %c0_1 = arith.constant 0 : index
    %3 = vector.load %arg2[%c0, %c0_1] : memref<16x128xf32, #tpu.memory_space<vmem>>, vector<16x128xf32>
    %c0_2 = arith.constant 0 : index
    %c0_3 = arith.constant 0 : index
    %4 = vector.load %arg3[%c0_2, %c0_3] : memref<16x128xf32, #tpu.memory_space<vmem>>, vector<16x128xf32>
    %5 = math.absf %3 : vector<16x128xf32>
    %cst = arith.constant 0.000000e+00 : f32
    %6 = vector.broadcast %cst : f32 to vector<16x128xf32>
    %7 = arith.subf %6, %5 : vector<16x128xf32>
    %8 = math.exp %7 : vector<16x128xf32>
    %cst_4 = arith.constant 1.000000e+00 : f32
    %9 = vector.broadcast %cst_4 : f32 to vector<16x128xf32>
    %10 = arith.addf %9, %8 : vector<16x128xf32>
    %11 = math.log %10 : vector<16x128xf32>
    %cst_5 = arith.constant 0.000000e+00 : f32
    %12 = vector.broadcast %cst_5 : f32 to vector<16x128xf32>
    %13 = arith.maximumf %3, %12 : vector<16x128xf32>
    %14 = arith.mulf %3, %4 : vector<16x128xf32>
    %15 = arith.subf %13, %14 : vector<16x128xf32>
    %16 = arith.addf %15, %11 : vector<16x128xf32>
    %cst_6 = arith.constant 0.000000e+00 : f32
    %17 = vector.broadcast %cst_6 : f32 to vector<16x128xf32>
    %18 = arith.cmpf ogt, %3, %17 : vector<16x128xf32>
    %cst_7 = arith.constant 5.000000e-01 : f32
    %19 = vector.broadcast %cst_7 : f32 to vector<16x128xf32>
    %20 = arith.cmpf ole, %4, %19 : vector<16x128xf32>
    %21 = arith.xori %18, %20 : vector<16x128xi1>
    %cst_8 = arith.constant 1.000000e+00 : f32
    %22 = vector.broadcast %cst_8 : f32 to vector<16x128xf32>
    %23 = arith.addf %22, %8 : vector<16x128xf32>
    %24 = tpu.reciprocal %23 : vector<16x128xf32> -> vector<16x128xf32>
    %cst_9 = arith.constant 1.000000e+00 : f32
    %25 = vector.broadcast %cst_9 : f32 to vector<16x128xf32>
    %26 = arith.select %21, %8, %25 : vector<16x128xi1>, vector<16x128xf32>
    %27 = arith.mulf %26, %24 : vector<16x128xf32>
    %28 = arith.mulf %27, %27 : vector<16x128xf32>
    %29 = arith.mulf %28, %16 : vector<16x128xf32>
    %c1_i32 = arith.constant 1 : i32
    %30 = arith.muli %arg0, %c1_i32 : i32
    %31 = arith.addi %30, %arg1 : i32
    %c1_i32_10 = arith.constant 1 : i32
    %32 = arith.cmpi slt, %31, %c1_i32_10 : i32
    %33 = arith.extui %32 : i1 to i32
    %c0_i32_11 = arith.constant 0 : i32
    %34 = arith.cmpi ne, %33, %c0_i32_11 : i32
    scf.if %34 {
      %c0_16 = arith.constant 0 : index
      %c0_17 = arith.constant 0 : index
      %41 = vector.load %arg5[%c0_16, %c0_17] : memref<8x128xf32, #tpu.memory_space<vmem>>, vector<8x128xf32>
      %42 = vector.shape_cast %29 : vector<16x128xf32> to vector<2x8x128xf32>
      %cst_18 = arith.constant dense<0.000000e+00> : vector<8x128xf32>
      %43 = vector.multi_reduction <add>, %42, %cst_18 [0] : vector<2x8x128xf32> to vector<8x128xf32>
      %44 = arith.addf %41, %43 : vector<8x128xf32>
      %c0_19 = arith.constant 0 : index
      %c0_20 = arith.constant 0 : index
      %45 = vector.load %arg5[%c0_19, %c0_20] : memref<8x128xf32, #tpu.memory_space<vmem>>, vector<8x128xf32>
      tpu.vector_store %arg5[%c0_19, %c0_20], %44 {strides = array<i32>} : memref<8x128xf32, #tpu.memory_space<vmem>>, vector<8x128xf32>,
    } else {
    }
    %c1_i32_12 = arith.constant 1 : i32
    %35 = arith.cmpi sge, %31, %c1_i32_12 : i32
    %36 = arith.extui %35 : i1 to i32
    %c0_i32_13 = arith.constant 0 : i32
    %37 = arith.cmpi ne, %36, %c0_i32_13 : i32
    scf.if %37 {
      %c2048_i32 = arith.constant 2048 : i32
      %41 = arith.muli %31, %c2048_i32 : i32
      %c2048_i32_16 = arith.constant 2048 : i32
      %42 = arith.subi %c2048_i32_16, %41 : i32
      %43 = tpu.iota {dimensions = array<i32: 0>} : vector<16x128xi32>
      %44 = tpu.iota {dimensions = array<i32: 1>} : vector<16x128xi32>
      %c128_i32 = arith.constant 128 : i32
      %45 = vector.broadcast %c128_i32 : i32 to vector<16x128xi32>
      %46 = arith.muli %43, %45 : vector<16x128xi32>
      %47 = arith.addi %46, %44 : vector<16x128xi32>
      %48 = vector.broadcast %42 : i32 to vector<16x128xi32>
      %49 = arith.cmpi slt, %47, %48 : vector<16x128xi32>
      %cst_17 = arith.constant 0.000000e+00 : f32
      %50 = vector.broadcast %cst_17 : f32 to vector<16x128xf32>
      %51 = arith.select %49, %29, %50 : vector<16x128xi1>, vector<16x128xf32>
      %c0_18 = arith.constant 0 : index
      %c0_19 = arith.constant 0 : index
      %52 = vector.load %arg5[%c0_18, %c0_19] : memref<8x128xf32, #tpu.memory_space<vmem>>, vector<8x128xf32>
      %53 = vector.shape_cast %51 : vector<16x128xf32> to vector<2x8x128xf32>
      %cst_20 = arith.constant dense<0.000000e+00> : vector<8x128xf32>
      %54 = vector.multi_reduction <add>, %53, %cst_20 [0] : vector<2x8x128xf32> to vector<8x128xf32>
      %55 = arith.addf %52, %54 : vector<8x128xf32>
      %c0_21 = arith.constant 0 : index
      %c0_22 = arith.constant 0 : index
      %56 = vector.load %arg5[%c0_21, %c0_22] : memref<8x128xf32, #tpu.memory_space<vmem>>, vector<8x128xf32>
      tpu.vector_store %arg5[%c0_21, %c0_22], %55 {strides = array<i32>} : memref<8x128xf32, #tpu.memory_space<vmem>>, vector<8x128xf32>,
    } else {
    }
    %c0_i32_14 = arith.constant 0 : i32
    %38 = arith.cmpi eq, %arg1, %c0_i32_14 : i32
    %39 = arith.extui %38 : i1 to i32
    %c0_i32_15 = arith.constant 0 : i32
    %40 = arith.cmpi ne, %39, %c0_i32_15 : i32
    scf.if %40 {
      %c0_16 = arith.constant 0 : index
      %c0_17 = arith.constant 0 : index
      %41 = vector.load %arg5[%c0_16, %c0_17] : memref<8x128xf32, #tpu.memory_space<vmem>>, vector<8x128xf32>
      %c0_18 = arith.constant 0 : index
      %c0_19 = arith.constant 0 : index
      %c0_20 = arith.constant 0 : index
      %42 = vector.load %arg4[%c0_18, %c0_19, %c0_20] : memref<1x8x128xf32, #tpu.memory_space<vmem>>, vector<1x8x128xf32>
      %43 = vector.shape_cast %42 : vector<1x8x128xf32> to vector<8x128xf32>
      %44 = vector.shape_cast %41 : vector<8x128xf32> to vector<1x8x128xf32>
      tpu.vector_store %arg4[%c0_18, %c0_19, %c0_20], %44 {strides = array<i32>} : memref<1x8x128xf32, #tpu.memory_space<vmem>>, vector<1x8x128xf32>,
    } else {
    }
    return
  }
  func.func @transform_0(%arg0: i32, %arg1: i32) -> (i32, i32) {
    %c1_i32 = arith.constant 1 : i32
    %0 = arith.muli %arg0, %c1_i32 : i32
    %1 = arith.addi %0, %arg1 : i32
    %c0_i32 = arith.constant 0 : i32
    %2 = arith.minsi %1, %c0_i32 : i32
    %c0_i32_0 = arith.constant 0 : i32
    %c0_i32_1 = arith.constant 0 : i32
    return %2, %c0_i32_0 : i32, i32
  }
  func.func @transform_1(%arg0: i32, %arg1: i32) -> (i32, i32) {
    %c1_i32 = arith.constant 1 : i32
    %0 = arith.muli %arg0, %c1_i32 : i32
    %1 = arith.addi %0, %arg1 : i32
    %c0_i32 = arith.constant 0 : i32
    %2 = arith.minsi %1, %c0_i32 : i32
    %c0_i32_0 = arith.constant 0 : i32
    %c0_i32_1 = arith.constant 0 : i32
    return %2, %c0_i32_0 : i32, i32
  }
  func.func @transform_2(%arg0: i32, %arg1: i32) -> (i32, i32, i32) {
    %c0_i32 = arith.constant 0 : i32
    %c0_i32_0 = arith.constant 0 : i32
    %c0_i32_1 = arith.constant 0 : i32
    return %arg0, %c0_i32, %c0_i32_0 : i32, i32, i32
  }
}

</mosaic_0001>

<llo_original>
// kernel: tpu_custom_call.1
$region0: #{tpu_custom_call.1}
  #allocation0 [shape = 'u32[]', space=smem, size = 0x4, offset = 0x4, fixed_abs, tag = 'smem constant byte address 0x4 - core index']
  #allocation1 [shape = 'u32[72,128]{1,0:T(1,128)}', space=vmem, size = 0x9000, scoped, tag = 'internal scratch']
  #allocation2 [shape = 'f32[8,128]{1,0:T(8,128)}', space=vmem, size = 0x1000, scoped, tag = 'scratch operand']
  %s0 = inlined_call_operand.hbm [shape: f32[16,128], index: 0, kind: input, shape index: {}]
  %s1 = inlined_call_operand.hbm [shape: f32[16,128], index: 1, kind: input, shape index: {}]
  %s2 = inlined_call_operand.hbm [shape: f32[1,8,128], index: 2, kind: output, shape index: {}]
  %s3 = sld [smem:[#allocation0]]
  $region42: #{tpu_custom_call.1} parent=0
    _
  %s5 = ssub.s32 1, %s3
  %s6 = scalar_select 0, %s5, %s3
  $region1: #{tpu_custom_call.1} parent=0
    #allocation3 [shape = 'u8[8192]{0}', space=vmem, size = 0x2000, scoped, tag = 'input window, operand 0, single buffered']
    #allocation4 [shape = 's32[1]{0}', space=sflag, size = 0x4, scoped, tag = 'scoped memory for tpu_custom_call.1']
    #allocation5 [shape = 's32[1]{0}', space=sflag, size = 0x4, scoped, tag = 'scoped memory for tpu_custom_call.1']
    #allocation6 [shape = 'u8[8192]{0}', space=vmem, size = 0x2000, scoped, tag = 'input window, operand 1, single buffered']
    #allocation7 [shape = 's32[1]{0}', space=sflag, size = 0x4, scoped, tag = 'scoped memory for tpu_custom_call.1']
    #allocation8 [shape = 'u8[4096]{0}', space=vmem, size = 0x1000, scoped, tag = 'output window, operand 0, single buffered']
    %7 = vsyncpa [#allocation4], 0
    %8 = vsyncpa [#allocation7], 0
    %9 = vsyncpa [#allocation5], 0
    // Predicated region
    $region2: #{tpu_custom_call.1} parent=1 // pred_check
      _
    $region3: #{tpu_custom_call.1} parent=1 // pred_check_branch
      %11 = sbr.rel (0) target = $region5
    $region4: #{tpu_custom_call.1} parent=1 // pred_region
      %s12 = sadd.s32 0, 0
      %p13 = scmp.lt.s32.totalorder %s12, 0
      %s14 = scalar_select %p13, %s12, 0
      %s15 = smul.u32 2, %s14
      %17 = vsyncadd [#allocation4], 0
      %s18 = smul.addr %s15, 8
      %s19 = scalar_lea.hbm %s0, %s18
      %s20 = sshll.u32 %s19, 4
      %s21 = int_to_ptr.hbm [resolvable:$true] %s20
      %s22 = sshll.u32 [#allocation3], 4
      %s23 = int_to_ptr.vmem [resolvable:$true] %s22
      %28 = dma.hbm_to_vmem [thread:$0]  %s21, 256, %s23, [#allocation4], 128, 128, 8
    $region5: #{tpu_custom_call.1} parent=1 // pred_fallthru
      _
    // Predicated region
    $region6: #{tpu_custom_call.1} parent=1 // pred_check
      _
    $region7: #{tpu_custom_call.1} parent=1 // pred_check_branch
      %30 = sbr.rel (0) target = $region9
    $region8: #{tpu_custom_call.1} parent=1 // pred_region
      %s31 = sadd.s32 0, 0
      %p32 = scmp.lt.s32.totalorder %s31, 0
      %s33 = scalar_select %p32, %s31, 0
      %s34 = smul.u32 2, %s33
      %36 = vsyncadd [#allocation7], 0
      %s37 = smul.addr %s34, 8
      %s38 = scalar_lea.hbm %s1, %s37
      %s39 = sshll.u32 %s38, 4
      %s40 = int_to_ptr.hbm [resolvable:$true] %s39
      %s41 = sshll.u32 [#allocation6], 4
      %s42 = int_to_ptr.vmem [resolvable:$true] %s41
      %47 = dma.hbm_to_vmem [thread:$0]  %s40, 256, %s42, [#allocation7], 128, 128, 8
    $region9: #{tpu_custom_call.1} parent=1 // pred_fallthru
      _
    // Predicated region
    $region10: #{tpu_custom_call.1} parent=1 // pred_check
      _
    $region11: #{tpu_custom_call.1} parent=1 // pred_check_branch
      %49 = sbr.rel (0) target = $region13
    $region12: #{tpu_custom_call.1} parent=1 // pred_region
      %51 = dma.done [#allocation4], 256
    $region13: #{tpu_custom_call.1} parent=1 // pred_fallthru
      _
    // Predicated region
    $region14: #{tpu_custom_call.1} parent=1 // pred_check
      _
    $region15: #{tpu_custom_call.1} parent=1 // pred_check_branch
      %53 = sbr.rel (0) target = $region17
    $region16: #{tpu_custom_call.1} parent=1 // pred_region
      %55 = dma.done [#allocation7], 256
    $region17: #{tpu_custom_call.1} parent=1 // pred_fallthru
      _
    %s56 = sadd.s32 0, 0
    %p57 = scmp.lt.s32.totalorder %s56, 0
    %s58 = scalar_select %p57, %s56, 0
    %s59 = smul.u32 2, %s58
    %s60 = sadd.s32 0, 0
    %p61 = scmp.lt.s32.totalorder %s60, 0
    %s62 = scalar_select %p61, %s60, 0
    %s63 = smul.u32 2, %s62
    %p64 = scmp.eq.s32.totalorder 0, 0
    // Predicated region
    $region18: #{tpu_custom_call.1} parent=1 // pred_check
      %p65 = pneg %p64
    $region19: #{tpu_custom_call.1} parent=1 // pred_check_branch
      %67 = sbr.rel (%p65) target = $region21
    $region20: #{tpu_custom_call.1} parent=1 // pred_region
      %68 = vst [vmem:[#allocation2] sm:$0xff] 0.0
    $region21: #{tpu_custom_call.1} parent=1 // pred_fallthru
      _
    %v69 = vld [vmem:[#allocation3] sm:$0xff]
    %v70 = vld [vmem:[#allocation3 + $0x8] sm:$0xff]
    %v71 = vld [vmem:[#allocation6] sm:$0xff]
    %v72 = vld [vmem:[#allocation6 + $0x8] sm:$0xff]
    %v73 = vand.u32 2147483647, %v69
    %v74 = vand.u32 2147483647, %v70
    %v75 = vsub.f32 0.0, %v73
    %v76 = vsub.f32 0.0, %v74
    %v77 = vmul.f32 %v75, 1.442695
    %v78 = vpow.pop %v77
    %v79 = vmul.f32 %v76, 1.442695
    %v80 = vpow.pop %v79
    %v81 = vadd.f32 %v78, 1.0
    %v82 = vadd.f32 %v80, 1.0
    %v83 = vlog2.pop %v81
    %v84 = vmul.f32 %v83, 0.6931472
    %v85 = vlog2.pop %v82
    %v86 = vmul.f32 %v85, 0.6931472
    %v87 = vmax.f32 %v69, 0.0
    %v88 = vmax.f32 %v70, 0.0
    %v89 = vmul.f32 %v69, %v71
    %v90 = vmul.f32 %v70, %v72
    %v91 = vsub.f32 %v87, %v89
    %v92 = vsub.f32 %v88, %v90
    %v93 = vadd.f32 %v91, %v84
    %v94 = vadd.f32 %v92, %v86
    %vm95 = vcmp.gt.f32.partialorder %v69, 0.0
    %vm96 = vcmp.gt.f32.partialorder %v70, 0.0
    %vm97 = vcmp.le.f32.partialorder %v71, 0.5
    %vm98 = vcmp.le.f32.partialorder %v72, 0.5
    %vm99 = vmxor %vm95, %vm97
    %vm100 = vmxor %vm96, %vm98
    %v101 = vrcp.pop %v81
    %v102 = vmul.f32 %v81, %v101
    %v103 = vsub.f32 1.0, %v102
    %v104 = vmul.f32 %v101, %v103
    %v105 = vadd.f32 %v101, %v104
    %vm106 = vweird.f32 %v81
    %vm107 = vweird.f32 %v101
    %vm108 = vmor %vm106, %vm107
    %v109 = vsel %vm108, %v101, %v105
    %v110 = vand.u32 2147483647, %v81
    %vm111 = vcmp.eq.f32.partialorder %v110, 8.507059e+37
    %v112 = vand.u32 %v81, 2147483648
    %v113 = vor.u32 1.1754944e-38, %v112
    %v114 = vsel %vm111, %v113, %v109
    %v115 = vrcp.pop %v82
    %v116 = vmul.f32 %v82, %v115
    %v117 = vsub.f32 1.0, %v116
    %v118 = vmul.f32 %v115, %v117
    %v119 = vadd.f32 %v115, %v118
    %vm120 = vweird.f32 %v82
    %vm121 = vweird.f32 %v115
    %vm122 = vmor %vm120, %vm121
    %v123 = vsel %vm122, %v115, %v119
    %v124 = vand.u32 2147483647, %v82
    %vm125 = vcmp.eq.f32.partialorder %v124, 8.507059e+37
    %v126 = vand.u32 %v82, 2147483648
    %v127 = vor.u32 1.1754944e-38, %v126
    %v128 = vsel %vm125, %v127, %v123
    %v129 = vsel %vm99, %v78, 1.0
    %v130 = vsel %vm100, %v80, 1.0
    %v131 = vmul.f32 %v129, %v114
    %v132 = vmul.f32 %v130, %v128
    %v133 = vmul.f32 %v131, %v131
    %v134 = vmul.f32 %v132, %v132
    %v135 = vmul.f32 %v133, %v93
    %v136 = vmul.f32 %v134, %v94
    %s137 = sadd.s32 0, 0
    %p138 = scmp.lt.s32.totalorder %s137, 1
    // Predicated region
    $region22: #{tpu_custom_call.1} parent=1 // pred_check
      %p139 = pneg %p138
    $region23: #{tpu_custom_call.1} parent=1 // pred_check_branch
      %141 = sbr.rel (%p139) target = $region25
    $region24: #{tpu_custom_call.1} parent=1 // pred_region
      %v142 = vld [vmem:[#allocation2] sm:$0xff]
      %v143 = vadd.f32 %v135, %v136
      %v144 = vadd.f32 %v142, %v143
      %145 = vst [vmem:[#allocation2] sm:$0xff] %v144
    $region25: #{tpu_custom_call.1} parent=1 // pred_fallthru
      _
    %p146 = scmp.ge.s32.totalorder %s137, 1
    // Predicated region
    $region26: #{tpu_custom_call.1} parent=1 // pred_check
      %p147 = pneg %p146
    $region27: #{tpu_custom_call.1} parent=1 // pred_check_branch
      %149 = sbr.rel (%p147) target = $region29
    $region28: #{tpu_custom_call.1} parent=1 // pred_region
      %s150 = smul.u32 %s137, 2048
      %s151 = ssub.s32 2048, %s150
      %v152 = vlaneseq
      %v153 = vshrl.u32 %v152, 7
      %v154 = vadd.s32 %v153, 8
      %v155 = vlaneseq
      %v156 = vand.u32 %v155, 127
      %v157 = vmul.u32 %v153, 128
      %v158 = vmul.u32 %v154, 128
      %v159 = vadd.s32 %v157, %v156
      %v160 = vadd.s32 %v158, %v156
      %v161 = vstv %s151
      %vm162 = vcmp.lt.s32.totalorder %v159, %v161
      %vm163 = vcmp.lt.s32.totalorder %v160, %v161
      %v164 = vsel %vm162, %v135, 0.0
      %v165 = vsel %vm163, %v136, 0.0
      %v166 = vld [vmem:[#allocation2] sm:$0xff]
      %v167 = vadd.f32 %v164, %v165
      %v168 = vadd.f32 %v166, %v167
      %169 = vst [vmem:[#allocation2] sm:$0xff] %v168
    $region29: #{tpu_custom_call.1} parent=1 // pred_fallthru
      _
    // Predicated region
    $region30: #{tpu_custom_call.1} parent=1 // pred_check
      %p170 = pneg %p64
    $region31: #{tpu_custom_call.1} parent=1 // pred_check_branch
      %172 = sbr.rel (%p170) target = $region33
    $region32: #{tpu_custom_call.1} parent=1 // pred_region
      %v173 = vld [vmem:[#allocation2] sm:$0xff]
      %174 = vst [vmem:[#allocation8] sm:$0xff] %v173
    $region33: #{tpu_custom_call.1} parent=1 // pred_fallthru
      _
    // Predicated region
    $region34: #{tpu_custom_call.1} parent=1 // pred_check
      _
    $region35: #{tpu_custom_call.1} parent=1 // pred_check_branch
      %176 = sbr.rel (0) target = $region37
    $region36: #{tpu_custom_call.1} parent=1 // pred_region
      %178 = vsyncadd [#allocation5], 0
      %s180 = sshll.u32 [#allocation8], 4
      %s181 = int_to_ptr.vmem [resolvable:$true] %s180
      %s182 = sshll.u32 %s2, 4
      %s183 = int_to_ptr.hbm [resolvable:$true] %s182
      %185 = dma.vmem_to_hbm [thread:$0]  %s181, 128, %s183, [#allocation5]
    $region37: #{tpu_custom_call.1} parent=1 // pred_fallthru
      _
    // Predicated region
    $region38: #{tpu_custom_call.1} parent=1 // pred_check
      _
    $region39: #{tpu_custom_call.1} parent=1 // pred_check_branch
      %187 = sbr.rel (0) target = $region41
    $region40: #{tpu_custom_call.1} parent=1 // pred_region
      %189 = dma.done [#allocation5], 128
    $region41: #{tpu_custom_call.1} parent=1 // pred_fallthru
      _
    %190 = vsyncpa [#allocation4], 1
    %191 = vsyncpa [#allocation7], 1
    %192 = vsyncpa [#allocation5], 1

</llo_original>
